<compile_context>
chip_gen: v7x
topology: tpu7x:2x2x1
jax: 0.10.0
libtpu: 0.0.40
codegen_flags: <defaults>
</compile_context>

<pallas_src>
import functools
from typing import Dict

import jax
import jax.numpy as jnp
import numpy as np
from jax.experimental import pallas as pl
from jax.experimental.pallas import tpu as pltpu


def _round_up(x, m):
    return ((x + m - 1) // m) * m


def _pick_tile_n(n_rows, vocab, itemsize, vmem_budget_bytes=8 * 1024 * 1024):
    """Largest row tile (multiple of 8, <=1024) whose double-buffered logits
    tile fits a conservative VMEM budget valid on v5e/v6e/v7x."""
    cap = vmem_budget_bytes // (2 * vocab * max(int(itemsize), 1))
    cap = int(max(8, min(1024, cap)))
    tile = min(cap, _round_up(n_rows, 8))
    tile = max(8, (tile // 8) * 8)
    return tile


def _ce_rows_kernel(labels_ref, logits_ref, nll_ref, *, n_rows, ignore_index):
    """One grid step handles a (tile_n, V) logits tile and writes (tile_n, 1)
    per-row negative log-likelihoods (masked rows write 0).  No carried state
    across grid steps -> the grid axis is fully parallel."""
    i = pl.program_id(0)
    logits = logits_ref[...]                       # (tile_n, V), native dtype
    labels = labels_ref[...]                       # (tile_n, 1), int32
    tile_n = logits.shape[0]

    # Numerically-stable log-sum-exp over the vocab (lane) axis.
    m = jnp.max(logits, axis=-1, keepdims=True)                    # native dtype
    shifted = (logits - m).astype(jnp.float32)
    lse = jnp.log(jnp.sum(jnp.exp(shifted), axis=-1, keepdims=True)) \
        + m.astype(jnp.float32)                                    # (tile_n, 1) f32

    # True-class logit via a select (no one-hot cast, no full-tile multiply).
    col = jax.lax.broadcasted_iota(jnp.int32, logits.shape, 1)
    true_logit = jnp.sum(
        jnp.where(col == labels, logits, jnp.zeros_like(logits)),
        axis=-1, keepdims=True).astype(jnp.float32)                # (tile_n, 1) f32

    nll = lse - true_logit                                         # (tile_n, 1) f32

    # Mask rows beyond N (overhanging last tile) and optional ignore_index rows.
    row = jax.lax.broadcasted_iota(jnp.int32, (tile_n, 1), 0) + i * tile_n
    valid = row < n_rows
    if ignore_index is not None:
        valid = jnp.logical_and(valid, labels != ignore_index)

    nll_ref[...] = jnp.where(valid, nll, jnp.zeros_like(nll))


def scaled_cross_entropy(logits, labels, scale, *, reduction="mean",
                         ignore_index=None, tile_n=None):
    """logits: (N, V) float (f32 or bf16), labels: (N,) int.
    Returns scale * CE with the requested reduction."""
    n, v = logits.shape
    labels2d = labels.reshape(n, 1).astype(jnp.int32)

    if tile_n is None:
        tile_n = _pick_tile_n(n, v, jnp.dtype(logits.dtype).itemsize)
    num_tiles = pl.cdiv(n, tile_n)
    padded_n = num_tiles * tile_n

    kernel = functools.partial(_ce_rows_kernel, n_rows=n,
                               ignore_index=ignore_index)

    per_row = pl.pallas_call(
        kernel,
        out_shape=jax.ShapeDtypeStruct((padded_n, 1), jnp.float32),
        grid_spec=pltpu.PrefetchScalarGridSpec(
            num_scalar_prefetch=0,
            grid=(num_tiles,),
            in_specs=[
                pl.BlockSpec((tile_n, 1), lambda i: (i, 0)),   # labels tile
                pl.BlockSpec((tile_n, v), lambda i: (i, 0)),   # logits tile
            ],
            out_specs=pl.BlockSpec((tile_n, 1), lambda i: (i, 0)),
        ),
        compiler_params=pltpu.CompilerParams(
            dimension_semantics=("parallel",),                 # megacore-friendly
            vmem_limit_bytes=32 * 1024 * 1024,
        ),
    )(labels2d, logits)

    scale = jnp.asarray(scale, dtype=jnp.float32)
    if reduction == "none":
        return scale * per_row[:n, 0]

    total = jnp.sum(per_row)          # padded/ignored rows were written as 0
    if reduction == "sum":
        return scale * total

    # 'mean'
    if ignore_index is None:
        denom = jnp.float32(n)
    else:
        denom = jnp.maximum(
            jnp.sum((labels != ignore_index).astype(jnp.float32)), 1.0)
    return scale * total / denom


class BaseLoss:
    """JAX mirror of dlk BaseLoss: schedule/scale selection + _calc."""

    def __init__(self, config: Dict):
        self.config = dict(config)
        pairs = self.config["pred_truth_pair"]
        if len(pairs) == 1:
            self.pred_name = list(pairs.keys())[0]
            self.truth_name = pairs[self.pred_name]
        else:
            assert len(pairs) < 1   # mirrors upstream placeholder behavior

    def update_config(self, rt_config: Dict):
        self.current_stage = 0
        self.config["schedule"] = [rt_config["total_steps"] * i
                                   for i in self.config["schedule"]]

    def _calc(self, result, inputs, rt_config, scale):
        # TODO(synk): BaseLoss._calc is abstract upstream; we use the canonical
        # logits/label_ids cross-entropy implied by pred_truth_pair suggestions.
        logits = result[self.pred_name]          # (B, S, V)
        labels = inputs[self.truth_name]         # (B, S)
        b, s, v = logits.shape
        reduction = self.config["reduction"]
        loss = scaled_cross_entropy(
            logits.reshape(b * s, v),
            labels.reshape(b * s),
            scale,
            reduction=reduction,
            ignore_index=self.config.get("ignore_index", None),
        )
        if reduction == "none":
            loss = loss.reshape(b, s)
        return loss

    def forward(self, result, inputs, rt_config):
        if rt_config["current_step"] > self.config["schedule"][self.current_stage]:
            self.current_stage += 1
        scale = self.config["scale"][self.current_stage]
        return self._calc(result, inputs, rt_config, scale)


if __name__ == "__main__":
    # small shapes: batch=2, seq=8, vocab=32
    B, S, V = 2, 8, 32
    key = jax.random.PRNGKey(0)
    k_logits, k_labels = jax.random.split(key)
    logits = jax.random.normal(k_logits, (B, S, V), dtype=jnp.float32)
    label_ids = jax.random.randint(k_labels, (B, S), 0, V, dtype=jnp.int32)

    config = {
        "schedule": [1],
        "scale": [1.0],
        "pred_truth_pair": {"logits": "label_ids"},
        "reduction": "mean",
        "log_map": {"loss": "loss"},
    }
    loss_mod = BaseLoss(config)
    loss_mod.update_config({"total_steps": 100, "total_epochs": 1})

    rt_config = {"current_step": 0, "current_epoch": 0,
                 "total_steps": 100, "total_epochs": 1}
    loss = loss_mod.forward({"logits": logits}, {"label_ids": label_ids}, rt_config)
    loss = jax.block_until_ready(loss)

    # pure-JAX reference (mean)
    flat_logits = logits.reshape(B * S, V).astype(jnp.float32)
    flat_labels = label_ids.reshape(B * S)
    lse = jax.nn.logsumexp(flat_logits, axis=-1)
    true_logit = jnp.take_along_axis(flat_logits, flat_labels[:, None], axis=-1)[:, 0]
    ref = 1.0 * jnp.mean(lse - true_logit)
    np.testing.assert_allclose(np.asarray(loss), np.asarray(ref),
                               rtol=1e-5, atol=1e-5)

    # ragged-N path: N=13 (not a multiple of the tile) exercises the masked
    # last tile, 'sum' reduction and a non-unit scale.
    n2 = 13
    l2 = flat_logits[:n2]
    y2 = flat_labels[:n2]
    out2 = scaled_cross_entropy(l2, y2, 2.0, reduction="sum", tile_n=8)
    out2 = jax.block_until_ready(out2)
    lse2 = jax.nn.logsumexp(l2, axis=-1)
    tl2 = jnp.take_along_axis(l2, y2[:, None], axis=-1)[:, 0]
    ref2 = 2.0 * jnp.sum(lse2 - tl2)
    np.testing.assert_allclose(np.asarray(out2), np.asarray(ref2),
                               rtol=1e-5, atol=1e-5)

    print("KERNEL_OK")
</pallas_src>

<mosaic_0001>
module attributes {stable_mosaic.version = 11 : i64} {
  func.func @_ce_rows_kernel(%arg0: i32, %arg1: memref<16x1xi32, #tpu.memory_space<vmem>>, %arg2: memref<16x32xf32, #tpu.memory_space<vmem>>, %arg3: memref<16x1xf32, #tpu.memory_space<vmem>>) attributes {dimension_semantics = [#tpu.dimension_semantics<parallel>], iteration_bounds = array<i64: 1>, scalar_prefetch = 0 : i64, scratch_operands = 0 : i64, tpu.core_type = #tpu.core_type<tc>, window_params = [{transform_indices = @transform_0, window_bounds = array<i64: 16, 1>}, {transform_indices = @transform_1, window_bounds = array<i64: 16, 32>}, {transform_indices = @transform_2, window_bounds = array<i64: 16, 1>}]} {
    %c0 = arith.constant 0 : index
    %c0_0 = arith.constant 0 : index
    %0 = vector.load %arg2[%c0, %c0_0] : memref<16x32xf32, #tpu.memory_space<vmem>>, vector<16x32xf32>
    %c0_1 = arith.constant 0 : index
    %c0_2 = arith.constant 0 : index
    %1 = vector.load %arg1[%c0_1, %c0_2] : memref<16x1xi32, #tpu.memory_space<vmem>>, vector<16x1xi32>
    %cst = arith.constant dense<0xFF800000> : vector<16xf32>
    %2 = vector.multi_reduction <maximumf>, %0, %cst [1] : vector<16x32xf32> to vector<16xf32>
    %3 = vector.shape_cast %2 : vector<16xf32> to vector<16x1xf32>
    %4 = vector.broadcast %3 : vector<16x1xf32> to vector<16x32xf32>
    %5 = arith.subf %0, %4 : vector<16x32xf32>
    %6 = math.exp %5 : vector<16x32xf32>
    %cst_3 = arith.constant dense<0.000000e+00> : vector<16xf32>
    %7 = vector.multi_reduction <add>, %6, %cst_3 [1] : vector<16x32xf32> to vector<16xf32>
    %8 = vector.shape_cast %7 : vector<16xf32> to vector<16x1xf32>
    %9 = math.log %8 : vector<16x1xf32>
    %10 = arith.addf %9, %3 : vector<16x1xf32>
    %11 = tpu.iota {dimensions = array<i32: 1>} : vector<16x32xi32>
    %12 = vector.broadcast %1 : vector<16x1xi32> to vector<16x32xi32>
    %13 = arith.cmpi eq, %11, %12 : vector<16x32xi32>
    %cst_4 = arith.constant 0.000000e+00 : f32
    %14 = vector.broadcast %cst_4 : f32 to vector<16x32xf32>
    %15 = arith.select %13, %0, %14 : vector<16x32xi1>, vector<16x32xf32>
    %cst_5 = arith.constant dense<0.000000e+00> : vector<16xf32>
    %16 = vector.multi_reduction <add>, %15, %cst_5 [1] : vector<16x32xf32> to vector<16xf32>
    %17 = vector.shape_cast %16 : vector<16xf32> to vector<16x1xf32>
    %18 = arith.subf %10, %17 : vector<16x1xf32>
    %19 = tpu.iota {dimensions = array<i32: 0>} : vector<16x1xi32>
    %c16_i32 = arith.constant 16 : i32
    %20 = arith.muli %arg0, %c16_i32 : i32
    %21 = vector.broadcast %20 : i32 to vector<16x1xi32>
    %22 = arith.addi %19, %21 : vector<16x1xi32>
    %c16_i32_6 = arith.constant 16 : i32
    %23 = vector.broadcast %c16_i32_6 : i32 to vector<16x1xi32>
    %24 = arith.cmpi slt, %22, %23 : vector<16x1xi32>
    %cst_7 = arith.constant 0.000000e+00 : f32
    %25 = vector.broadcast %cst_7 : f32 to vector<16x1xf32>
    %26 = arith.select %24, %18, %25 : vector<16x1xi1>, vector<16x1xf32>
    %c0_8 = arith.constant 0 : index
    %c0_9 = arith.constant 0 : index
    %27 = vector.load %arg3[%c0_8, %c0_9] : memref<16x1xf32, #tpu.memory_space<vmem>>, vector<16x1xf32>
    tpu.vector_store %arg3[%c0_8, %c0_9], %26 {strides = array<i32>} : memref<16x1xf32, #tpu.memory_space<vmem>>, vector<16x1xf32>,
    return
  }
  func.func @transform_0(%arg0: i32) -> (i32, i32) {
    %c0_i32 = arith.constant 0 : i32
    %c0_i32_0 = arith.constant 0 : i32
    return %arg0, %c0_i32 : i32, i32
  }
  func.func @transform_1(%arg0: i32) -> (i32, i32) {
    %c0_i32 = arith.constant 0 : i32
    %c0_i32_0 = arith.constant 0 : i32
    return %arg0, %c0_i32 : i32, i32
  }
  func.func @transform_2(%arg0: i32) -> (i32, i32) {
    %c0_i32 = arith.constant 0 : i32
    %c0_i32_0 = arith.constant 0 : i32
    return %arg0, %c0_i32 : i32, i32
  }
}

</mosaic_0001>

<llo_original>
// kernel: tpu_custom_call.1
$region0: #{tpu_custom_call.1}
  #allocation0 [shape = 'u32[]', space=smem, size = 0x4, offset = 0x4, fixed_abs, tag = 'smem constant byte address 0x4 - core index']
  #allocation1 [shape = 'u32[144,128]{1,0:T(1,128)}', space=vmem, size = 0x12000, scoped, tag = 'internal scratch']
  %s0 = inlined_call_operand.vmem [shape: s32[16,1], index: 0, kind: input, shape index: {}]
  %s1 = inlined_call_operand.vmem [shape: f32[16,32], index: 1, kind: input, shape index: {}]
  %s2 = inlined_call_operand.vmem [shape: f32[16,1], index: 2, kind: output, shape index: {}]
  %s3 = sld [smem:[#allocation0]]
  $region18: #{tpu_custom_call.1} parent=0
    _
  %s5 = ssub.s32 1, %s3
  %s6 = scalar_select 0, %s5, %s3
  // Predicated region
  $region2: #{tpu_custom_call.1} parent=0 // pred_check
    _
  $region3: #{tpu_custom_call.1} parent=0 // pred_check_branch
    %8 = sbr.rel (0) target = $region5
  $region4: #{tpu_custom_call.1} parent=0 // pred_region
    _
  $region5: #{tpu_custom_call.1} parent=0 // pred_fallthru
    _
  // Predicated region
  $region6: #{tpu_custom_call.1} parent=0 // pred_check
    _
  $region7: #{tpu_custom_call.1} parent=0 // pred_check_branch
    %10 = sbr.rel (0) target = $region9
  $region8: #{tpu_custom_call.1} parent=0 // pred_region
    _
  $region9: #{tpu_custom_call.1} parent=0 // pred_fallthru
    _
  %v11 = vld [vmem:[%s1] sm:$0xff]
  %v12 = vld [vmem:[%s1 + $0x8] sm:$0xff]
  %v13 = vld [vmem:[%s0] sm:$0xff]
  %v14 = vld [vmem:[%s0 + $0x8] sm:$0xff]
  %vm15 = vcmask 261120
  %v16 = vsel %vm15, %v11, -inf
  %17 = vmax.xlane.f32.xlu0 %v16
  %v18 = vpop.xlane.xlu0 %17
  %v19 = vsel %vm15, %v12, -inf
  %20 = vmax.xlane.f32.xlu0 %v19
  %v21 = vpop.xlane.xlu0 %20
  %v22 = vsub.f32 %v11, %v18
  %v23 = vsub.f32 %v12, %v21
  %v24 = vmul.f32 %v22, 1.442695
  %v25 = vpow.pop %v24
  %v26 = vmul.f32 %v23, 1.442695
  %v27 = vpow.pop %v26
  %v28 = vsel %vm15, %v25, 0.0
  %29 = vadd.xlane.f32.xlu0 %v28
  %v30 = vpop.xlane.xlu0 %29
  %v31 = vsel %vm15, %v27, 0.0
  %32 = vadd.xlane.f32.xlu0 %v31
  %v33 = vpop.xlane.xlu0 %32
  %v34 = vlog2.pop %v30
  %v35 = vmul.f32 %v34, 0.6931472
  %v36 = vlog2.pop %v33
  %v37 = vmul.f32 %v36, 0.6931472
  %v38 = vadd.f32 %v35, %v18
  %v39 = vadd.f32 %v37, %v21
  %v40 = vlaneseq
  %v41 = vand.u32 %v40, 127
  %42 = vset.pattern.permute.xlu0 0
  %43 = vperm.xlu0 %42, %v13
  %v44 = vpop.permute.xlu0 %43
  %45 = vset.pattern.permute.xlu0 0
  %46 = vperm.xlu0 %45, %v14
  %v47 = vpop.permute.xlu0 %46
  %vm48 = vcmp.eq.s32.totalorder %v41, %v44
  %vm49 = vcmp.eq.s32.totalorder %v41, %v47
  %v50 = vsel %vm48, %v11, 0.0
  %v51 = vsel %vm49, %v12, 0.0
  %v52 = vsel %vm15, %v50, 0.0
  %53 = vadd.xlane.f32.xlu0 %v52
  %v54 = vpop.xlane.xlu0 %53
  %v55 = vsel %vm15, %v51, 0.0
  %56 = vadd.xlane.f32.xlu0 %v55
  %v57 = vpop.xlane.xlu0 %56
  %v58 = vsub.f32 %v38, %v54
  %v59 = vsub.f32 %v39, %v57
  %v60 = vlaneseq
  %v61 = vshrl.u32 %v60, 7
  %v62 = vadd.s32 %v61, 8
  %s63 = smul.u32 0, 16
  %v64 = vstv %s63
  %v65 = vadd.s32 %v61, %v64
  %v66 = vadd.s32 %v62, %v64
  %vm67 = vcmp.lt.s32.totalorder %v65, 16
  %vm68 = vcmp.lt.s32.totalorder %v66, 16
  %v69 = vsel %vm67, %v58, 0.0
  %v70 = vsel %vm68, %v59, 0.0
  %vm71 = vcmask 7168
  %72 = vst.msk [vmem:[%s2] sm:$0xff] %vm71, %v69
  %73 = vst.msk [vmem:[%s2 + $0x8] sm:$0xff] %vm71, %v70
  // Predicated region
  $region10: #{tpu_custom_call.1} parent=0 // pred_check
    _
  $region11: #{tpu_custom_call.1} parent=0 // pred_check_branch
    %75 = sbr.rel (0) target = $region13
  $region12: #{tpu_custom_call.1} parent=0 // pred_region
    _
  $region13: #{tpu_custom_call.1} parent=0 // pred_fallthru
    _
  // Predicated region
  $region14: #{tpu_custom_call.1} parent=0 // pred_check
    _
  $region15: #{tpu_custom_call.1} parent=0 // pred_check_branch
    %77 = sbr.rel (0) target = $region17
  $region16: #{tpu_custom_call.1} parent=0 // pred_region
    _
  $region17: #{tpu_custom_call.1} parent=0 // pred_fallthru
    _

</llo_original>
